<compile_context>
chip_gen: v6e
topology: v6e:2x2x1
jax: 0.10.0
libtpu: 0.0.40
codegen_flags: <defaults>
</compile_context>

<pallas_src>
import functools

import numpy as np
import jax
import jax.numpy as jnp
from jax import lax
from jax.experimental import pallas as pl
from jax.experimental.pallas import tpu as pltpu

_NUM_STATS = 4        # per foreground class: [ce_sum, sum(p*t), sum(p), sum(t)]
_LANES = 128
_SMOOTH = 1e-5        # TODO(synk): DiceLoss source not provided; standard soft-dice smooth term used.
_MAX_TILE_ROWS = 2048     # 2048 rows x 128 lanes = 256K voxels per tile
_TMP_ARRAYS = 6           # VMEM allowance for in-flight f32 elementwise temporaries (per row)


@functools.lru_cache(maxsize=None)
def _vmem_limit_bytes():
    """Generation-aware VMEM limit: <=48 MiB on v7x (64 MiB physical), up to 96 MiB on v5e/v6e."""
    try:
        cap = int(pltpu.get_tpu_info().vmem_capacity_bytes)
    except Exception:
        cap = 0
    if cap <= 0:
        cap = 64 * 1024 * 1024        # conservative default (v7x per-TensorCore VMEM)
    return int(min(cap * 3 // 4, 96 * 1024 * 1024))


def _hadf_sums_kernel(p_ref, t_ref, sums_ref, acc_ce, acc_pt, acc_p, acc_t, *,
                      rows_total, tiles_per_group, ragged):
    """Accumulates, over spatial (rows x 128-lane) tiles, the four per-foreground-class
    sums needed for the binary (class-vs-background) CE and Dice losses."""
    g = pl.program_id(0)
    s = pl.program_id(2)
    ns = pl.num_programs(2)

    @pl.when(s == 0)
    def _():
        acc_ce[...] = jnp.zeros_like(acc_ce)
        acc_pt[...] = jnp.zeros_like(acc_pt)
        acc_p[...] = jnp.zeros_like(acc_p)
        acc_t[...] = jnp.zeros_like(acc_t)

    nc = p_ref.shape[1] - 1          # foreground classes only (class-0 stats are dead)
    r = p_ref.shape[2]               # tile rows

    def accumulate(valid_rows):
        # Slice off class 0 at the Ref level (cheap: major, non-tiled dim).
        p = p_ref[0, 1:].astype(jnp.float32)            # (nc, r, 128)
        is_fg = t_ref[0, 1:] > 0.5                      # (nc, r, 128) bool

        if valid_rows is not None:                      # masked path: ragged / OOB tile
            row = lax.broadcasted_iota(jnp.int32, (nc, r, _LANES), 1)
            valid = row < valid_rows
            p = jnp.where(valid, p, 0.0)
            is_fg = jnp.logical_and(is_fg, valid)

        # CE (NLL of log-probs): fg voxels use p, bg voxels use 1-p, single lower
        # clamp (softmax probs are <= 1 so the upper clamp is redundant).  The
        # sign flip happens once per sample in the finalize below.
        x = jnp.maximum(jnp.where(is_fg, p, 1.0 - p), 1e-10)
        logx = jnp.log(x)
        tf = is_fg.astype(jnp.float32)
        pt = jnp.where(is_fg, p, 0.0)

        def rsum(v):                                    # (nc, r, 128) -> (nc, 1)
            return jnp.sum(jnp.sum(v, axis=1), axis=-1, keepdims=True)

        acc_ce[...] += rsum(logx)
        acc_pt[...] += rsum(pt)
        acc_p[...] += rsum(p)
        acc_t[...] += rsum(tf)

    if ragged:
        # Only tiles that actually overrun the spatial range pay for masking.
        start_row = (g * tiles_per_group + s) * r
        fits = start_row + r <= rows_total

        @pl.when(fits)
        def _():
            accumulate(None)

        @pl.when(jnp.logical_not(fits))
        def _():
            accumulate(rows_total - start_row)          # may be <= 0 (fully OOB tile)
    else:
        accumulate(None)

    @pl.when(s == ns - 1)
    def _():
        sums_ref[0, 0, :, 0:1] = -acc_ce[...]           # negate the CE sum once here
        sums_ref[0, 0, :, 1:2] = acc_pt[...]
        sums_ref[0, 0, :, 2:3] = acc_p[...]
        sums_ref[0, 0, :, 3:4] = acc_t[...]


def _pick_tile_rows(rows_total, c, nc, p_item, t_item, budget_bytes, max_rows):
    """Largest row tile whose double-buffered inputs + elementwise temporaries fit the budget."""
    per_row = (2 * _LANES * c * (p_item + t_item)        # 2x double-buffered prob + target rows
               + _LANES * nc * 4 * _TMP_ARRAYS)          # f32 temporaries headroom
    cap = max(1, int(budget_bytes) // per_row)
    cap = min(cap, _MAX_TILE_ROWS)
    if max_rows is not None:
        cap = min(cap, max(1, int(max_rows)))
    if rows_total <= cap:
        return int(rows_total)                           # single full-extent tile
    align = {4: 8, 2: 16, 1: 32}.get(int(min(p_item, t_item)), 8)
    r = max(align, (cap // align) * align)
    return int(min(r, rows_total))


def _per_class_sums(p4, t4, *, max_tile_rows=None, num_spatial_groups=2):
    """p4/t4: (B, C, rows, 128). Returns (B, C-1, NUM_STATS) f32 sums."""
    B, C, rows_total, lanes = p4.shape
    assert lanes == _LANES
    nc = C - 1

    vmem_limit = _vmem_limit_bytes()
    r = _pick_tile_rows(rows_total, C, nc, p4.dtype.itemsize, t4.dtype.itemsize,
                        vmem_limit // 2, max_tile_rows)
    ns_total = (rows_total + r - 1) // r
    G = max(1, min(int(num_spatial_groups), ns_total))   # spatial groups (v7x: 2 TensorCores)
    spt = (ns_total + G - 1) // G                        # tiles per group
    ragged = (G * spt * r) != rows_total

    def in_map(g, a, s):
        # Clamp so tiles past the end (only possible when ragged) never issue an
        # out-of-range DMA; their data is fully masked in-kernel anyway.
        return (a, 0, jnp.minimum(g * spt + s, ns_total - 1), 0)

    kernel = functools.partial(_hadf_sums_kernel, rows_total=rows_total,
                               tiles_per_group=spt, ragged=ragged)

    partial_sums = pl.pallas_call(
        kernel,
        out_shape=jax.ShapeDtypeStruct((G, B, nc, _NUM_STATS), jnp.float32),
        grid_spec=pltpu.PrefetchScalarGridSpec(
            num_scalar_prefetch=0,
            grid=(G, B, spt),
            in_specs=[
                pl.BlockSpec((1, C, r, _LANES), in_map),
                pl.BlockSpec((1, C, r, _LANES), in_map),
            ],
            out_specs=pl.BlockSpec((1, 1, nc, _NUM_STATS), lambda g, a, s: (g, a, 0, 0)),
            scratch_shapes=[pltpu.VMEM((nc, 1), jnp.float32)] * 4,
        ),
        compiler_params=pltpu.CompilerParams(
            dimension_semantics=("parallel", "parallel", "arbitrary"),
            vmem_limit_bytes=vmem_limit),
    )(p4, t4)

    return jnp.sum(partial_sums, axis=0)                 # (B, nc, NUM_STATS)


def _combine_fg(ce, dice, tsum):
    """Tail of HADFLoss.forward over foreground classes 1..C-1 (class presence,
    adaptive class weights).  ce/dice/tsum: (B, C-1)."""
    present = (tsum > 0.0).astype(jnp.float32)           # class 0 already excluded

    batch_class_total = jnp.sum(dice * present, axis=0)
    batch_class_counts = jnp.sum(present, axis=0)
    batch_class_avg = batch_class_total / (batch_class_counts + 1e-10)

    # TODO(synk): the PyTorch module keeps a deque of the last 50 batch losses
    # (cross-call state); only the single-call (history length 1) case is done.
    class_avg = jnp.where(batch_class_avg > 0.0, batch_class_avg, 0.0)

    valid = (class_avg > 0.0).astype(jnp.float32)
    n_valid = jnp.sum(valid)
    mean_loss = jnp.where(
        n_valid > 0.0,
        jnp.sum(class_avg * valid) / jnp.maximum(n_valid, 1.0),
        jnp.float32(1.0),
    )
    class_weights = jnp.maximum(class_avg / mean_loss, 0.5)

    w = class_weights[None, :]
    ce_loss = jnp.sum(ce * present * w)
    dice_loss = jnp.sum(dice * present * w)
    return ce_loss + dice_loss


def hadf_loss(net_output, target, *, smooth=_SMOOTH, max_tile_rows=None,
              num_spatial_groups=2):
    """net_output: (B, C, D, H, W) probabilities; target: (B, C, D, H, W) one-hot."""
    B, C = net_output.shape[:2]
    assert C >= 2 and target.shape[:2] == (B, C)
    S = int(np.prod(net_output.shape[2:]))

    rows_total = -(-S // _LANES)
    S_pad = rows_total * _LANES

    # Native dtype into the kernel (no f32 pre-cast, no argmax pre-pass).
    p = jnp.reshape(net_output, (B, C, S))
    t = jnp.reshape(target, (B, C, S))
    if S_pad != S:
        # Unavoidable copy only when S is not a multiple of 128; zero padding is
        # exactly neutral for all four sums (the finalize divides by the true S).
        p = jnp.pad(p, ((0, 0), (0, 0), (0, S_pad - S)))
        t = jnp.pad(t, ((0, 0), (0, 0), (0, S_pad - S)))
    p = jnp.reshape(p, (B, C, rows_total, _LANES))
    t = jnp.reshape(t, (B, C, rows_total, _LANES))

    sums = _per_class_sums(p, t, max_tile_rows=max_tile_rows,
                           num_spatial_groups=num_spatial_groups)   # (B, C-1, 4)

    n = jnp.float32(S)
    ce_sum = sums[:, :, 0]
    pt = sums[:, :, 1]                        # sum p over target voxels (fg intersection)
    ps = sums[:, :, 2]                        # sum p
    tsum = sums[:, :, 3]                      # #voxels of class i

    ce = ce_sum / n                           # mean NLL over voxels
    # Background sums derived algebraically (deviation <= 1e-10 * S << smooth):
    #   sum p0 = n - sum p ; sum t0 = n - sum t ; sum p0*t0 = n - sum p - sum t + sum p*t
    dice_fg = (2.0 * pt + smooth) / (ps + tsum + smooth)
    dice_bg = (2.0 * (n - ps - tsum + pt) + smooth) / ((n - ps) + (n - tsum) + smooth)
    dice = 1.0 - 0.5 * (dice_fg + dice_bg)    # 2-class soft dice loss

    return _combine_fg(ce, dice, tsum)


def _reference_loss(net_output, target, *, smooth=_SMOOTH):
    """Pure-jnp reference (same math, no Pallas) for a correctness check."""
    B, C = net_output.shape[:2]
    S = int(np.prod(net_output.shape[2:]))
    p = jnp.reshape(net_output, (B, C, S)).astype(jnp.float32)[:, 1:]
    t = jnp.reshape(target, (B, C, S)).astype(jnp.float32)[:, 1:]
    pc = jnp.clip(p, 1e-10, 1.0)
    p0 = jnp.clip(1.0 - p, 1e-10, 1.0)
    t0 = 1.0 - t
    ce = jnp.mean(-jnp.log(jnp.where(t > 0.5, pc, p0)), axis=-1)
    dice_fg = (2.0 * jnp.sum(p * t, -1) + smooth) / (jnp.sum(p, -1) + jnp.sum(t, -1) + smooth)
    dice_bg = (2.0 * jnp.sum(p0 * t0, -1) + smooth) / (jnp.sum(p0, -1) + jnp.sum(t0, -1) + smooth)
    dice = 1.0 - 0.5 * (dice_fg + dice_bg)
    tsum = jnp.sum(t, -1)
    return _combine_fg(ce, dice, tsum)


if __name__ == "__main__":
    def make_inputs(key, B, C, D, H, W, dtype=jnp.float32):
        k1, k2 = jax.random.split(key)
        logits = jax.random.normal(k1, (B, C, D, H, W), dtype=jnp.float32)
        probs = jax.nn.softmax(logits, axis=1).astype(dtype)   # channel-wise probs
        labels = jax.random.randint(k2, (B, D, H, W), 0, C)
        onehot = jnp.transpose(jax.nn.one_hot(labels, C, dtype=dtype), (0, 4, 1, 2, 3))
        return probs, onehot

    key = jax.random.PRNGKey(0)
    k1, k2, k3 = jax.random.split(key, 3)

    # Case 1: small f32 input, S multiple of 128, single tile / single group.
    p1, t1 = make_inputs(k1, 2, 4, 4, 8, 8, dtype=jnp.float32)        # S = 256
    out1 = jax.block_until_ready(hadf_loss(p1, t1))
    ref1 = jax.block_until_ready(_reference_loss(p1, t1))
    assert np.isfinite(float(out1)), "loss is not finite"
    np.testing.assert_allclose(float(out1), float(ref1), rtol=1e-4, atol=1e-4)

    # Case 2: bf16, B=1, forced small tiles: 2 spatial groups + multi-tile
    # accumulation per group + a ragged tile and a fully out-of-range tile.
    p2, t2 = make_inputs(k2, 1, 4, 8, 16, 40, dtype=jnp.bfloat16)     # S = 5120 -> 40 rows
    out2 = jax.block_until_ready(hadf_loss(p2, t2, max_tile_rows=16))
    ref2 = jax.block_until_ready(_reference_loss(p2, t2))
    assert np.isfinite(float(out2)), "loss is not finite"
    np.testing.assert_allclose(float(out2), float(ref2), rtol=1e-3, atol=1e-3)

    # Case 3: f32 with S not a multiple of 128 (wrapper zero-pads the lane axis).
    p3, t3 = make_inputs(k3, 2, 4, 3, 10, 10, dtype=jnp.float32)      # S = 300
    out3 = jax.block_until_ready(hadf_loss(p3, t3))
    ref3 = jax.block_until_ready(_reference_loss(p3, t3))
    assert np.isfinite(float(out3)), "loss is not finite"
    np.testing.assert_allclose(float(out3), float(ref3), rtol=1e-4, atol=1e-4)

    print("KERNEL_OK")
</pallas_src>

<mosaic_0001>
module attributes {stable_mosaic.version = 11 : i64} {
  func.func @_hadf_sums_kernel(%arg0: i32, %arg1: i32, %arg2: i32, %arg3: memref<1x4x2x128xf32, #tpu.memory_space<vmem>>, %arg4: memref<1x4x2x128xf32, #tpu.memory_space<vmem>>, %arg5: memref<1x1x3x4xf32, #tpu.memory_space<vmem>>, %arg6: memref<3x1xf32, #tpu.memory_space<vmem>>, %arg7: memref<3x1xf32, #tpu.memory_space<vmem>>, %arg8: memref<3x1xf32, #tpu.memory_space<vmem>>, %arg9: memref<3x1xf32, #tpu.memory_space<vmem>>) attributes {dimension_semantics = [#tpu.dimension_semantics<parallel>, #tpu.dimension_semantics<parallel>, #tpu.dimension_semantics<arbitrary>], iteration_bounds = array<i64: 1, 2, 1>, scalar_prefetch = 0 : i64, scratch_operands = 4 : i64, tpu.core_type = #tpu.core_type<tc>, window_params = [{transform_indices = @transform_0, window_bounds = array<i64: 1, 4, 2, 128>}, {transform_indices = @transform_1, window_bounds = array<i64: 1, 4, 2, 128>}, {transform_indices = @transform_2, window_bounds = array<i64: 1, 1, 3, 4>}]} {
    %c0_i32 = arith.constant 0 : i32
    %0 = arith.cmpi eq, %arg2, %c0_i32 : i32
    %1 = arith.extui %0 : i1 to i32
    %c0_i32_0 = arith.constant 0 : i32
    %2 = arith.cmpi ne, %1, %c0_i32_0 : i32
    scf.if %2 {
      %cst_36 = arith.constant 0.000000e+00 : f32
      %46 = vector.broadcast %cst_36 : f32 to vector<3x1xf32>
      %c0_37 = arith.constant 0 : index
      %c0_38 = arith.constant 0 : index
      %47 = vector.load %arg6[%c0_37, %c0_38] : memref<3x1xf32, #tpu.memory_space<vmem>>, vector<3x1xf32>
      tpu.vector_store %arg6[%c0_37, %c0_38], %46 {strides = array<i32>} : memref<3x1xf32, #tpu.memory_space<vmem>>, vector<3x1xf32>,
      %cst_39 = arith.constant 0.000000e+00 : f32
      %48 = vector.broadcast %cst_39 : f32 to vector<3x1xf32>
      %c0_40 = arith.constant 0 : index
      %c0_41 = arith.constant 0 : index
      %49 = vector.load %arg7[%c0_40, %c0_41] : memref<3x1xf32, #tpu.memory_space<vmem>>, vector<3x1xf32>
      tpu.vector_store %arg7[%c0_40, %c0_41], %48 {strides = array<i32>} : memref<3x1xf32, #tpu.memory_space<vmem>>, vector<3x1xf32>,
      %cst_42 = arith.constant 0.000000e+00 : f32
      %50 = vector.broadcast %cst_42 : f32 to vector<3x1xf32>
      %c0_43 = arith.constant 0 : index
      %c0_44 = arith.constant 0 : index
      %51 = vector.load %arg8[%c0_43, %c0_44] : memref<3x1xf32, #tpu.memory_space<vmem>>, vector<3x1xf32>
      tpu.vector_store %arg8[%c0_43, %c0_44], %50 {strides = array<i32>} : memref<3x1xf32, #tpu.memory_space<vmem>>, vector<3x1xf32>,
      %cst_45 = arith.constant 0.000000e+00 : f32
      %52 = vector.broadcast %cst_45 : f32 to vector<3x1xf32>
      %c0_46 = arith.constant 0 : index
      %c0_47 = arith.constant 0 : index
      %53 = vector.load %arg9[%c0_46, %c0_47] : memref<3x1xf32, #tpu.memory_space<vmem>>, vector<3x1xf32>
      tpu.vector_store %arg9[%c0_46, %c0_47], %52 {strides = array<i32>} : memref<3x1xf32, #tpu.memory_space<vmem>>, vector<3x1xf32>,
    } else {
    }
    %c0 = arith.constant 0 : index
    %c1 = arith.constant 1 : index
    %c0_1 = arith.constant 0 : index
    %c0_2 = arith.constant 0 : index
    %3 = vector.load %arg3[%c0, %c1, %c0_1, %c0_2] : memref<1x4x2x128xf32, #tpu.memory_space<vmem>>, vector<1x3x2x128xf32>
    %4 = vector.shape_cast %3 : vector<1x3x2x128xf32> to vector<3x2x128xf32>
    %c0_3 = arith.constant 0 : index
    %c1_4 = arith.constant 1 : index
    %c0_5 = arith.constant 0 : index
    %c0_6 = arith.constant 0 : index
    %5 = vector.load %arg4[%c0_3, %c1_4, %c0_5, %c0_6] : memref<1x4x2x128xf32, #tpu.memory_space<vmem>>, vector<1x3x2x128xf32>
    %6 = vector.shape_cast %5 : vector<1x3x2x128xf32> to vector<3x2x128xf32>
    %cst = arith.constant 5.000000e-01 : f32
    %7 = vector.broadcast %cst : f32 to vector<3x2x128xf32>
    %8 = arith.cmpf ogt, %6, %7 : vector<3x2x128xf32>
    %cst_7 = arith.constant 1.000000e+00 : f32
    %9 = vector.broadcast %cst_7 : f32 to vector<3x2x128xf32>
    %10 = arith.subf %9, %4 : vector<3x2x128xf32>
    %11 = arith.select %8, %4, %10 : vector<3x2x128xi1>, vector<3x2x128xf32>
    %cst_8 = arith.constant 1.000000e-10 : f32
    %12 = vector.broadcast %cst_8 : f32 to vector<3x2x128xf32>
    %13 = arith.maximumf %11, %12 : vector<3x2x128xf32>
    %14 = math.log %13 : vector<3x2x128xf32>
    %15 = arith.extui %8 : vector<3x2x128xi1> to vector<3x2x128xi32>
    %16 = arith.sitofp %15 : vector<3x2x128xi32> to vector<3x2x128xf32>
    %cst_9 = arith.constant 0.000000e+00 : f32
    %17 = vector.broadcast %cst_9 : f32 to vector<3x2x128xf32>
    %18 = arith.select %8, %4, %17 : vector<3x2x128xi1>, vector<3x2x128xf32>
    %c0_10 = arith.constant 0 : index
    %c0_11 = arith.constant 0 : index
    %19 = vector.load %arg6[%c0_10, %c0_11] : memref<3x1xf32, #tpu.memory_space<vmem>>, vector<3x1xf32>
    %cst_12 = arith.constant dense<0.000000e+00> : vector<3x128xf32>
    %20 = vector.multi_reduction <add>, %14, %cst_12 [1] : vector<3x2x128xf32> to vector<3x128xf32>
    %cst_13 = arith.constant dense<0.000000e+00> : vector<3xf32>
    %21 = vector.multi_reduction <add>, %20, %cst_13 [1] : vector<3x128xf32> to vector<3xf32>
    %22 = vector.shape_cast %21 : vector<3xf32> to vector<3x1xf32>
    %23 = arith.addf %19, %22 : vector<3x1xf32>
    %c0_14 = arith.constant 0 : index
    %c0_15 = arith.constant 0 : index
    %24 = vector.load %arg6[%c0_14, %c0_15] : memref<3x1xf32, #tpu.memory_space<vmem>>, vector<3x1xf32>
    tpu.vector_store %arg6[%c0_14, %c0_15], %23 {strides = array<i32>} : memref<3x1xf32, #tpu.memory_space<vmem>>, vector<3x1xf32>,
    %c0_16 = arith.constant 0 : index
    %c0_17 = arith.constant 0 : index
    %25 = vector.load %arg7[%c0_16, %c0_17] : memref<3x1xf32, #tpu.memory_space<vmem>>, vector<3x1xf32>
    %cst_18 = arith.constant dense<0.000000e+00> : vector<3x128xf32>
    %26 = vector.multi_reduction <add>, %18, %cst_18 [1] : vector<3x2x128xf32> to vector<3x128xf32>
    %cst_19 = arith.constant dense<0.000000e+00> : vector<3xf32>
    %27 = vector.multi_reduction <add>, %26, %cst_19 [1] : vector<3x128xf32> to vector<3xf32>
    %28 = vector.shape_cast %27 : vector<3xf32> to vector<3x1xf32>
    %29 = arith.addf %25, %28 : vector<3x1xf32>
    %c0_20 = arith.constant 0 : index
    %c0_21 = arith.constant 0 : index
    %30 = vector.load %arg7[%c0_20, %c0_21] : memref<3x1xf32, #tpu.memory_space<vmem>>, vector<3x1xf32>
    tpu.vector_store %arg7[%c0_20, %c0_21], %29 {strides = array<i32>} : memref<3x1xf32, #tpu.memory_space<vmem>>, vector<3x1xf32>,
    %c0_22 = arith.constant 0 : index
    %c0_23 = arith.constant 0 : index
    %31 = vector.load %arg8[%c0_22, %c0_23] : memref<3x1xf32, #tpu.memory_space<vmem>>, vector<3x1xf32>
    %cst_24 = arith.constant dense<0.000000e+00> : vector<3x128xf32>
    %32 = vector.multi_reduction <add>, %4, %cst_24 [1] : vector<3x2x128xf32> to vector<3x128xf32>
    %cst_25 = arith.constant dense<0.000000e+00> : vector<3xf32>
    %33 = vector.multi_reduction <add>, %32, %cst_25 [1] : vector<3x128xf32> to vector<3xf32>
    %34 = vector.shape_cast %33 : vector<3xf32> to vector<3x1xf32>
    %35 = arith.addf %31, %34 : vector<3x1xf32>
    %c0_26 = arith.constant 0 : index
    %c0_27 = arith.constant 0 : index
    %36 = vector.load %arg8[%c0_26, %c0_27] : memref<3x1xf32, #tpu.memory_space<vmem>>, vector<3x1xf32>
    tpu.vector_store %arg8[%c0_26, %c0_27], %35 {strides = array<i32>} : memref<3x1xf32, #tpu.memory_space<vmem>>, vector<3x1xf32>,
    %c0_28 = arith.constant 0 : index
    %c0_29 = arith.constant 0 : index
    %37 = vector.load %arg9[%c0_28, %c0_29] : memref<3x1xf32, #tpu.memory_space<vmem>>, vector<3x1xf32>
    %cst_30 = arith.constant dense<0.000000e+00> : vector<3x128xf32>
    %38 = vector.multi_reduction <add>, %16, %cst_30 [1] : vector<3x2x128xf32> to vector<3x128xf32>
    %cst_31 = arith.constant dense<0.000000e+00> : vector<3xf32>
    %39 = vector.multi_reduction <add>, %38, %cst_31 [1] : vector<3x128xf32> to vector<3xf32>
    %40 = vector.shape_cast %39 : vector<3xf32> to vector<3x1xf32>
    %41 = arith.addf %37, %40 : vector<3x1xf32>
    %c0_32 = arith.constant 0 : index
    %c0_33 = arith.constant 0 : index
    %42 = vector.load %arg9[%c0_32, %c0_33] : memref<3x1xf32, #tpu.memory_space<vmem>>, vector<3x1xf32>
    tpu.vector_store %arg9[%c0_32, %c0_33], %41 {strides = array<i32>} : memref<3x1xf32, #tpu.memory_space<vmem>>, vector<3x1xf32>,
    %c0_i32_34 = arith.constant 0 : i32
    %43 = arith.cmpi eq, %arg2, %c0_i32_34 : i32
    %44 = arith.extui %43 : i1 to i32
    %c0_i32_35 = arith.constant 0 : i32
    %45 = arith.cmpi ne, %44, %c0_i32_35 : i32
    scf.if %45 {
      %c0_36 = arith.constant 0 : index
      %c0_37 = arith.constant 0 : index
      %46 = vector.load %arg6[%c0_36, %c0_37] : memref<3x1xf32, #tpu.memory_space<vmem>>, vector<3x1xf32>
      %cst_38 = arith.constant 0.000000e+00 : f32
      %47 = vector.broadcast %cst_38 : f32 to vector<3x1xf32>
      %48 = arith.subf %47, %46 : vector<3x1xf32>
      %c0_39 = arith.constant 0 : index
      %c0_40 = arith.constant 0 : index
      %c0_41 = arith.constant 0 : index
      %c0_42 = arith.constant 0 : index
      %49 = vector.load %arg5[%c0_39, %c0_40, %c0_41, %c0_42] : memref<1x1x3x4xf32, #tpu.memory_space<vmem>>, vector<1x1x3x1xf32>
      %50 = vector.shape_cast %49 : vector<1x1x3x1xf32> to vector<3x1xf32>
      %51 = vector.shape_cast %48 : vector<3x1xf32> to vector<1x1x3x1xf32>
      tpu.vector_store %arg5[%c0_39, %c0_40, %c0_41, %c0_42], %51 {strides = array<i32>} : memref<1x1x3x4xf32, #tpu.memory_space<vmem>>, vector<1x1x3x1xf32>,
      %c0_43 = arith.constant 0 : index
      %c0_44 = arith.constant 0 : index
      %52 = vector.load %arg7[%c0_43, %c0_44] : memref<3x1xf32, #tpu.memory_space<vmem>>, vector<3x1xf32>
      %c0_45 = arith.constant 0 : index
      %c0_46 = arith.constant 0 : index
      %c0_47 = arith.constant 0 : index
      %c1_48 = arith.constant 1 : index
      %53 = vector.load %arg5[%c0_45, %c0_46, %c0_47, %c1_48] : memref<1x1x3x4xf32, #tpu.memory_space<vmem>>, vector<1x1x3x1xf32>
      %54 = vector.shape_cast %53 : vector<1x1x3x1xf32> to vector<3x1xf32>
      %55 = vector.shape_cast %52 : vector<3x1xf32> to vector<1x1x3x1xf32>
      tpu.vector_store %arg5[%c0_45, %c0_46, %c0_47, %c1_48], %55 {strides = array<i32>} : memref<1x1x3x4xf32, #tpu.memory_space<vmem>>, vector<1x1x3x1xf32>,
      %c0_49 = arith.constant 0 : index
      %c0_50 = arith.constant 0 : index
      %56 = vector.load %arg8[%c0_49, %c0_50] : memref<3x1xf32, #tpu.memory_space<vmem>>, vector<3x1xf32>
      %c0_51 = arith.constant 0 : index
      %c0_52 = arith.constant 0 : index
      %c0_53 = arith.constant 0 : index
      %c2 = arith.constant 2 : index
      %57 = vector.load %arg5[%c0_51, %c0_52, %c0_53, %c2] : memref<1x1x3x4xf32, #tpu.memory_space<vmem>>, vector<1x1x3x1xf32>
      %58 = vector.shape_cast %57 : vector<1x1x3x1xf32> to vector<3x1xf32>
      %59 = vector.shape_cast %56 : vector<3x1xf32> to vector<1x1x3x1xf32>
      tpu.vector_store %arg5[%c0_51, %c0_52, %c0_53, %c2], %59 {strides = array<i32>} : memref<1x1x3x4xf32, #tpu.memory_space<vmem>>, vector<1x1x3x1xf32>,
      %c0_54 = arith.constant 0 : index
      %c0_55 = arith.constant 0 : index
      %60 = vector.load %arg9[%c0_54, %c0_55] : memref<3x1xf32, #tpu.memory_space<vmem>>, vector<3x1xf32>
      %c0_56 = arith.constant 0 : index
      %c0_57 = arith.constant 0 : index
      %c0_58 = arith.constant 0 : index
      %c3 = arith.constant 3 : index
      %61 = vector.load %arg5[%c0_56, %c0_57, %c0_58, %c3] : memref<1x1x3x4xf32, #tpu.memory_space<vmem>>, vector<1x1x3x1xf32>
      %62 = vector.shape_cast %61 : vector<1x1x3x1xf32> to vector<3x1xf32>
      %63 = vector.shape_cast %60 : vector<3x1xf32> to vector<1x1x3x1xf32>
      tpu.vector_store %arg5[%c0_56, %c0_57, %c0_58, %c3], %63 {strides = array<i32>} : memref<1x1x3x4xf32, #tpu.memory_space<vmem>>, vector<1x1x3x1xf32>,
    } else {
    }
    return
  }
  func.func @transform_0(%arg0: i32, %arg1: i32, %arg2: i32) -> (i32, i32, i32, i32) {
    %c1_i32 = arith.constant 1 : i32
    %0 = arith.muli %arg0, %c1_i32 : i32
    %1 = arith.addi %0, %arg2 : i32
    %c0_i32 = arith.constant 0 : i32
    %2 = arith.minsi %1, %c0_i32 : i32
    %c0_i32_0 = arith.constant 0 : i32
    %c0_i32_1 = arith.constant 0 : i32
    %c0_i32_2 = arith.constant 0 : i32
    return %arg1, %c0_i32_0, %2, %c0_i32_1 : i32, i32, i32, i32
  }
  func.func @transform_1(%arg0: i32, %arg1: i32, %arg2: i32) -> (i32, i32, i32, i32) {
    %c1_i32 = arith.constant 1 : i32
    %0 = arith.muli %arg0, %c1_i32 : i32
    %1 = arith.addi %0, %arg2 : i32
    %c0_i32 = arith.constant 0 : i32
    %2 = arith.minsi %1, %c0_i32 : i32
    %c0_i32_0 = arith.constant 0 : i32
    %c0_i32_1 = arith.constant 0 : i32
    %c0_i32_2 = arith.constant 0 : i32
    return %arg1, %c0_i32_0, %2, %c0_i32_1 : i32, i32, i32, i32
  }
  func.func @transform_2(%arg0: i32, %arg1: i32, %arg2: i32) -> (i32, i32, i32, i32) {
    %c0_i32 = arith.constant 0 : i32
    %c0_i32_0 = arith.constant 0 : i32
    %c0_i32_1 = arith.constant 0 : i32
    return %arg0, %arg1, %c0_i32, %c0_i32_0 : i32, i32, i32, i32
  }
}

</mosaic_0001>

<llo_original>
// kernel: tpu_custom_call.1
$region0: #{tpu_custom_call.1}
  #allocation0 [shape = 'u32[]', space=smem, size = 0x4, offset = 0x4, fixed_abs, tag = 'smem constant byte address 0x4 - core index']
  #allocation1 [shape = 'u32[144,128]{1,0:T(1,128)}', space=vmem, size = 0x12000, scoped, tag = 'internal scratch']
  #allocation2 [shape = 'f32[3,1]{1,0:T(4,128)}', space=vmem, size = 0x800, scoped, tag = 'scratch operand']
  #allocation3 [shape = 'f32[3,1]{1,0:T(4,128)}', space=vmem, size = 0x800, scoped, tag = 'scratch operand']
  #allocation4 [shape = 'f32[3,1]{1,0:T(4,128)}', space=vmem, size = 0x800, scoped, tag = 'scratch operand']
  #allocation5 [shape = 'f32[3,1]{1,0:T(4,128)}', space=vmem, size = 0x800, scoped, tag = 'scratch operand']
  %s0 = inlined_call_operand.hbm [shape: f32[2,4,2,128], index: 0, kind: input, shape index: {}]
  %s1 = inlined_call_operand.hbm [shape: f32[2,4,2,128], index: 1, kind: input, shape index: {}]
  %s2 = inlined_call_operand.vmem [shape: f32[1,2,3,4], index: 2, kind: output, shape index: {}]
  %s3 = sld [smem:[#allocation0]]
  $region57: #{tpu_custom_call.1} parent=0
    _
  %s5 = ssub.s32 1, %s3
  %s6 = scalar_select 0, %s5, %s3
  $region1: #{tpu_custom_call.1} parent=0
    #allocation6 [shape = 'u8[8192]{0}', space=vmem, size = 0x2000, scoped, tag = 'input window, operand 0']
    #allocation7 [shape = 's32[2]{0}', space=sflag, size = 0x8, scoped, tag = 'scoped memory for tpu_custom_call.1']
    #allocation8 [shape = 'u8[8192]{0}', space=vmem, size = 0x2000, scoped, tag = 'input window, operand 1']
    #allocation9 [shape = 's32[2]{0}', space=sflag, size = 0x8, scoped, tag = 'scoped memory for tpu_custom_call.1']
    %7 = vsyncpa [#allocation7], 0
    %s8 = scalar_lea.sflag [#allocation7], 1
    %9 = vsyncpa %s8, 0
    %10 = vsyncpa [#allocation9], 0
    %s11 = scalar_lea.sflag [#allocation9], 1
    %12 = vsyncpa %s11, 0
    loop: start=0, step=1, limit=4
    $region2: #{tpu_custom_call.1} parent=1 // loop_pre_header
      _
    $region3: #{tpu_custom_call.1} parent=1 // loop_header
      %s14 = sphi 0, %s18
      %p15 = scmp.ge.s32.totalorder %s14, 4
      %s21 = sphi 0, %s40
      %s22 = sphi 0, %s36
      %s23 = sphi 0, %s32
      %s24 = sphi 0, %s21
      %s25 = sphi 0, %s22
      %s26 = sphi 0, %s23
      %s27 = sphi 0, %s24
      %s28 = sphi 0, %s25
      %s29 = sphi 0, %s26
      %s51 = sphi 0, %s53
      %s54 = sphi 0, %s51
      %s55 = sphi 0, %s54
      %s71 = sphi 0, %s55
      %s85 = sphi 0, %s87
      %s88 = sphi 0, %s85
      %s89 = sphi 0, %s88
      %s105 = sphi 0, %s89
      %s113 = sphi 0, %s115
      %s116 = sphi 0, %s113
      %s117 = sphi 0, %s116
      %s133 = sphi 0, %s117
    $region4: #{tpu_custom_call.1} parent=1 // loop_header_branch
      %17 = sbr.rel (%p15) target = $region8
    $region5: #{tpu_custom_call.1} parent=1 // loop_body
      %s19 = ssub.s32 %s14, 1
      %s20 = ssub.s32 %s14, 2
      %s30 = sadd.s32 1, %s23
      %p31 = scmp.ge.s32.totalorder %s30, 1
      %s32 = scalar_select %p31, 0, %s30
      %s33 = sadd.s32 1, %s22
      %s34 = scalar_select %p31, %s33, %s22
      %p35 = scmp.ge.s32.totalorder %s34, 2
      %s36 = scalar_select %p35, 0, %s34
      %s37 = sadd.s32 1, %s21
      %s38 = scalar_select %p35, %s37, %s21
      %p39 = scmp.ge.s32.totalorder %s38, 1
      %s40 = scalar_select %p39, 0, %s38
      %s41 = sadd.s32 %s21, %s23
      %p42 = scmp.lt.s32.totalorder %s41, 0
      %s43 = scalar_select %p42, %s41, 0
      %s44 = sadd.s32 %s40, %s32
      %p45 = scmp.lt.s32.totalorder %s44, 0
      %s46 = scalar_select %p45, %s44, 0
      %s47 = ssub.s32 %s22, %s36
      %s48 = ssub.s32 %s43, %s46
      %s49 = sor.u32 %s47, %s48
      %p50 = scmp.eq.s32.totalorder %s49, 0
      %s52 = sadd.s32 %s51, 1
      %s53 = scalar_select %p50, %s51, %s52
      %p56 = pneg %p50
      %p57 = scmp.eq.s32.totalorder %s14, 1
      %p58 = por %p56, %p57
      %p59 = scmp.ne.s32.totalorder %s51, %s54
      %p60 = scmp.eq.s32.totalorder %s14, 0
      %p61 = por %p59, %p60
      %p62 = scmp.ne.s32.totalorder %s51, %s54
      %p63 = scmp.eq.s32.totalorder %s19, 1
      %p64 = por %p62, %p63
      %p65 = scmp.ne.s32.totalorder %s54, %s55
      %p66 = scmp.eq.s32.totalorder %s19, 0
      %p67 = por %p65, %p66
      %p68 = scmp.ne.s32.totalorder %s54, %s55
      %p69 = scmp.eq.s32.totalorder %s20, 1
      %p70 = por %p68, %p69
      %p72 = scmp.ne.s32.totalorder %s55, %s71
      %p73 = scmp.eq.s32.totalorder %s20, 0
      %p74 = por %p72, %p73
      %s75 = sadd.s32 %s21, %s23
      %p76 = scmp.lt.s32.totalorder %s75, 0
      %s77 = scalar_select %p76, %s75, 0
      %s78 = sadd.s32 %s40, %s32
      %p79 = scmp.lt.s32.totalorder %s78, 0
      %s80 = scalar_select %p79, %s78, 0
      %s81 = ssub.s32 %s22, %s36
      %s82 = ssub.s32 %s77, %s80
      %s83 = sor.u32 %s81, %s82
      %p84 = scmp.eq.s32.totalorder %s83, 0
      %s86 = sadd.s32 %s85, 1
      %s87 = scalar_select %p84, %s85, %s86
      %p90 = pneg %p84
      %p91 = scmp.eq.s32.totalorder %s14, 1
      %p92 = por %p90, %p91
      %p93 = scmp.ne.s32.totalorder %s85, %s88
      %p94 = scmp.eq.s32.totalorder %s14, 0
      %p95 = por %p93, %p94
      %p96 = scmp.ne.s32.totalorder %s85, %s88
      %p97 = scmp.eq.s32.totalorder %s19, 1
      %p98 = por %p96, %p97
      %p99 = scmp.ne.s32.totalorder %s88, %s89
      %p100 = scmp.eq.s32.totalorder %s19, 0
      %p101 = por %p99, %p100
      %p102 = scmp.ne.s32.totalorder %s88, %s89
      %p103 = scmp.eq.s32.totalorder %s20, 1
      %p104 = por %p102, %p103
      %p106 = scmp.ne.s32.totalorder %s89, %s105
      %p107 = scmp.eq.s32.totalorder %s20, 0
      %p108 = por %p106, %p107
      %s109 = ssub.s32 %s21, %s40
      %s110 = ssub.s32 %s22, %s36
      %s111 = sor.u32 %s109, %s110
      %p112 = scmp.eq.s32.totalorder %s111, 0
      %s114 = sadd.s32 %s113, 1
      %s115 = scalar_select %p112, %s113, %s114
      %p118 = pneg %p112
      %p119 = scmp.eq.s32.totalorder %s14, 1
      %p120 = por %p118, %p119
      %p121 = scmp.ne.s32.totalorder %s113, %s116
      %p122 = scmp.eq.s32.totalorder %s14, 0
      %p123 = por %p121, %p122
      %p124 = scmp.ne.s32.totalorder %s113, %s116
      %p125 = scmp.eq.s32.totalorder %s19, 1
      %p126 = por %p124, %p125
      %p127 = scmp.ne.s32.totalorder %s116, %s117
      %p128 = scmp.eq.s32.totalorder %s19, 0
      %p129 = por %p127, %p128
      %p130 = scmp.ne.s32.totalorder %s116, %s117
      %p131 = scmp.eq.s32.totalorder %s20, 1
      %p132 = por %p130, %p131
      %p134 = scmp.ne.s32.totalorder %s117, %s133
      %p135 = scmp.eq.s32.totalorder %s20, 0
      %p136 = por %p134, %p135
      %p137 = scmp.le.s32.totalorder 1, %s14
      %p138 = scmp.lt.s32.totalorder %s14, 3
      %p139 = pnand %p137, %p138
      %p140 = pneg %p139
      // Predicated region
      $region9: #{tpu_custom_call.1} parent=5 // pred_check
        _
      $region10: #{tpu_custom_call.1} parent=5 // pred_check_branch
        %142 = sbr.rel (%p139) target = $region12
      $region11: #{tpu_custom_call.1} parent=5 // pred_region
        %s143 = ssub.s32 %s14, 1
      $region12: #{tpu_custom_call.1} parent=5 // pred_fallthru
        _
      %p144 = scmp.lt.s32.totalorder %s14, 2
      // Predicated region
      $region13: #{tpu_custom_call.1} parent=5 // pred_check
        %p145 = pneg %p144
      $region14: #{tpu_custom_call.1} parent=5 // pred_check_branch
        %147 = sbr.rel (%p145) target = $region16
      $region15: #{tpu_custom_call.1} parent=5 // pred_region
        // Predicated region
        $region17: #{tpu_custom_call.1} parent=15 // pred_check
          %p148 = pneg %p61
        $region18: #{tpu_custom_call.1} parent=15 // pred_check_branch
          %150 = sbr.rel (%p148) target = $region20
        $region19: #{tpu_custom_call.1} parent=15 // pred_region
          %s151 = sand.u32 %s51, 1
          %s152 = scalar_lea.sflag [#allocation7], %s151
          %s153 = sand.u32 %s51, 1
          %s154 = smul.addr %s153, 8
          %s155 = scalar_lea.vmem [#allocation6], %s154
          %s156 = sadd.s32 %s21, %s23
          %p157 = scmp.lt.s32.totalorder %s156, 0
          %s158 = scalar_select %p157, %s156, 0
          %s160 = ssub.s32 128, 128
          %161 = vsyncadd %s152, %s160
          %s162 = smul.addr %s22, 4
          %s163 = sadd.s32 %s158, %s162
          %s164 = smul.addr %s163, 32
          %s165 = scalar_lea.hbm %s0, %s164
          %s166 = sshll.u32 %s155, 4
          %s167 = int_to_ptr.vmem [resolvable:$true] %s166
          %172 = dma.hbm_to_vmem [thread:$0]  %s165, 128, %s167, %s152, 32, 32, 2
        $region20: #{tpu_custom_call.1} parent=15 // pred_fallthru
          _
        // Predicated region
        $region21: #{tpu_custom_call.1} parent=15 // pred_check
          %p173 = pneg %p95
        $region22: #{tpu_custom_call.1} parent=15 // pred_check_branch
          %175 = sbr.rel (%p173) target = $region24
        $region23: #{tpu_custom_call.1} parent=15 // pred_region
          %s176 = sand.u32 %s85, 1
          %s177 = scalar_lea.sflag [#allocation9], %s176
          %s178 = sand.u32 %s85, 1
          %s179 = smul.addr %s178, 8
          %s180 = scalar_lea.vmem [#allocation8], %s179
          %s181 = sadd.s32 %s21, %s23
          %p182 = scmp.lt.s32.totalorder %s181, 0
          %s183 = scalar_select %p182, %s181, 0
          %s185 = ssub.s32 128, 128
          %186 = vsyncadd %s177, %s185
          %s187 = smul.addr %s22, 4
          %s188 = sadd.s32 %s183, %s187
          %s189 = smul.addr %s188, 32
          %s190 = scalar_lea.hbm %s1, %s189
          %s191 = sshll.u32 %s180, 4
          %s192 = int_to_ptr.vmem [resolvable:$true] %s191
          %197 = dma.hbm_to_vmem [thread:$0]  %s190, 128, %s192, %s177, 32, 32, 2
        $region24: #{tpu_custom_call.1} parent=15 // pred_fallthru
          _
      $region16: #{tpu_custom_call.1} parent=5 // pred_fallthru
        _
      %p198 = scmp.le.s32.totalorder 1, %s14
      %p199 = scmp.lt.s32.totalorder %s14, 3
      %p200 = pnand %p198, %p199
      %p201 = pneg %p200
      // Predicated region
      $region25: #{tpu_custom_call.1} parent=5 // pred_check
        _
      $region26: #{tpu_custom_call.1} parent=5 // pred_check_branch
        %203 = sbr.rel (%p200) target = $region28
      $region27: #{tpu_custom_call.1} parent=5 // pred_region
        %s204 = ssub.s32 %s14, 1
        %s205 = sand.u32 %s54, 1
        %s206 = scalar_lea.sflag [#allocation7], %s205
        %s207 = sand.u32 %s54, 1
        %s208 = smul.addr %s207, 8
        %s209 = scalar_lea.vmem [#allocation6], %s208
        // Predicated region
        $region29: #{tpu_custom_call.1} parent=27 // pred_check
          %p210 = pneg %p67
        $region30: #{tpu_custom_call.1} parent=27 // pred_check_branch
          %212 = sbr.rel (%p210) target = $region32
        $region31: #{tpu_custom_call.1} parent=27 // pred_region
          %213 = dma.done %s206, 128
        $region32: #{tpu_custom_call.1} parent=27 // pred_fallthru
          _
        %s214 = sand.u32 %s88, 1
        %s215 = scalar_lea.sflag [#allocation9], %s214
        %s216 = sand.u32 %s88, 1
        %s217 = smul.addr %s216, 8
        %s218 = scalar_lea.vmem [#allocation8], %s217
        // Predicated region
        $region33: #{tpu_custom_call.1} parent=27 // pred_check
          %p219 = pneg %p101
        $region34: #{tpu_custom_call.1} parent=27 // pred_check_branch
          %221 = sbr.rel (%p219) target = $region36
        $region35: #{tpu_custom_call.1} parent=27 // pred_region
          %222 = dma.done %s215, 128
        $region36: #{tpu_custom_call.1} parent=27 // pred_fallthru
          _
        %s223 = sand.u32 %s54, 1
        %s224 = scalar_lea.sflag [#allocation7], %s223
        %s225 = sand.u32 %s54, 1
        %s226 = smul.addr %s225, 8
        %s227 = scalar_lea.vmem [#allocation6], %s226
        %p228 = pneg %p67
        %p229 = pneg %p64
        %s230 = sand.u32 %s88, 1
        %s231 = scalar_lea.sflag [#allocation9], %s230
        %s232 = sand.u32 %s88, 1
        %s233 = smul.addr %s232, 8
        %s234 = scalar_lea.vmem [#allocation8], %s233
        %p235 = pneg %p101
        %p236 = pneg %p98
        %p237 = pneg %p129
        %p238 = pneg %p126
        %p239 = scmp.lt.s32.totalorder %s24, 0
        %s240 = scalar_select %p239, %s24, 0
        %p241 = scmp.lt.s32.totalorder %s25, 1
        %s242 = scalar_select %p241, %s25, 1
        %s243 = smul.addr %s240, 2
        %s244 = sadd.s32 %s242, %s243
        %s245 = smul.addr %s244, 4
        %s246 = scalar_lea.vmem %s2, %s245
        %s247 = sadd.s32 %s24, %s26
        %p248 = scmp.lt.s32.totalorder %s247, 0
        %s249 = scalar_select %p248, %s247, 0
        %s250 = sadd.s32 %s24, %s26
        %p251 = scmp.lt.s32.totalorder %s250, 0
        %s252 = scalar_select %p251, %s250, 0
        %p253 = scmp.lt.s32.totalorder %s24, 0
        %s254 = scalar_select %p253, %s24, 0
        %p255 = scmp.lt.s32.totalorder %s25, 1
        %s256 = scalar_select %p255, %s25, 1
        %s257 = smul.addr %s254, 2
        %s258 = sadd.s32 %s256, %s257
        %s259 = smul.addr %s258, 4
        %s260 = scalar_lea.vmem %s2, %s259
        %p261 = scmp.eq.s32.totalorder %s26, 0
        // Predicated region
        $region37: #{tpu_custom_call.1} parent=27 // pred_check
          %p262 = pneg %p261
        $region38: #{tpu_custom_call.1} parent=27 // pred_check_branch
          %264 = sbr.rel (%p262) target = $region40
        $region39: #{tpu_custom_call.1} parent=27 // pred_region
          %vm265 = vcmask 2048
          %266 = vst.msk [vmem:[#allocation2] sm:$0x7] %vm265, 0.0
          %267 = vst.msk [vmem:[#allocation3] sm:$0x7] %vm265, 0.0
          %268 = vst.msk [vmem:[#allocation4] sm:$0x7] %vm265, 0.0
          %269 = vst.msk [vmem:[#allocation5] sm:$0x7] %vm265, 0.0
        $region40: #{tpu_custom_call.1} parent=27 // pred_fallthru
          _
        %s270 = scalar_lea.vmem %s209, 2 [#allocation6]
        %v271 = vld [vmem:[%s270] sm:$0x3]
        %v272 = vld [vmem:[%s270 + $0x2] sm:$0x3]
        %v273 = vld [vmem:[%s270 + $0x4] sm:$0x3]
        %s274 = scalar_lea.vmem %s218, 2 [#allocation8]
        %v275 = vld [vmem:[%s274] sm:$0x3]
        %v276 = vld [vmem:[%s274 + $0x2] sm:$0x3]
        %v277 = vld [vmem:[%s274 + $0x4] sm:$0x3]
        %vm278 = vcmp.gt.f32.partialorder %v275, 0.5
        %vm279 = vcmp.gt.f32.partialorder %v276, 0.5
        %vm280 = vcmp.gt.f32.partialorder %v277, 0.5
        %v281 = vsub.f32 1.0, %v271
        %v282 = vsub.f32 1.0, %v272
        %v283 = vsub.f32 1.0, %v273
        %v284 = vsel %vm278, %v271, %v281
        %v285 = vsel %vm279, %v272, %v282
        %v286 = vsel %vm280, %v273, %v283
        %v287 = vmax.f32 %v284, 1e-10
        %v288 = vmax.f32 %v285, 1e-10
        %v289 = vmax.f32 %v286, 1e-10
        %v290 = vlog2.pop %v287
        %v291 = vmul.f32 %v290, 0.6931472
        %v292 = vlog2.pop %v288
        %v293 = vmul.f32 %v292, 0.6931472
        %v294 = vlog2.pop %v289
        %v295 = vmul.f32 %v294, 0.6931472
        %v296 = vsel %vm278, 1, 0
        %v297 = vsel %vm279, 1, 0
        %v298 = vsel %vm280, 1, 0
        %v299 = vcvt.s32.f32 %v296
        %v300 = vcvt.s32.f32 %v297
        %v301 = vcvt.s32.f32 %v298
        %v302 = vsel %vm278, %v271, 0.0
        %v303 = vsel %vm279, %v272, 0.0
        %v304 = vsel %vm280, %v273, 0.0
        %v305 = vld [vmem:[#allocation2] sm:$0x7]
        %vm306 = vcmask 1041408
        %v307 = vsel %vm306, %v291, 0.0
        %v308 = vrot.slane %v307, 4
        %v309 = vadd.f32 %v307, %v308
        %v310 = vrot.slane %v309, 2
        %v311 = vadd.f32 %v309, %v310
        %v312 = vrot.slane %v311, 1
        %v313 = vadd.f32 %v311, %v312
        %v314 = vsel %vm306, %v293, 0.0
        %v315 = vrot.slane %v314, 4
        %v316 = vadd.f32 %v314, %v315
        %v317 = vrot.slane %v316, 2
        %v318 = vadd.f32 %v316, %v317
        %v319 = vrot.slane %v318, 1
        %v320 = vadd.f32 %v318, %v319
        %v321 = vsel %vm306, %v295, 0.0
        %v322 = vrot.slane %v321, 4
        %v323 = vadd.f32 %v321, %v322
        %v324 = vrot.slane %v323, 2
        %v325 = vadd.f32 %v323, %v324
        %v326 = vrot.slane %v325, 1
        %v327 = vadd.f32 %v325, %v326
        %vm331 = vcmask 1041409
        %v332 = vsel %vm331, %v320, %v313
        %vm333 = vcmask 1042434
        %v334 = vsel %vm333, %v327, %v332
        %vm336 = vcmask 1042432
        %v337 = vsel %vm336, %v334, 0.0
        %338 = vadd.xlane.f32.xlu0 %v337
        %v339 = vpop.xlane.xlu0 %338
        %v340 = vadd.f32 %v305, %v339
        %vm341 = vcmask 2048
        %342 = vst.msk [vmem:[#allocation2] sm:$0x7] %vm341, %v340
        %v343 = vld [vmem:[#allocation3] sm:$0x7]
        %v344 = vsel %vm306, %v302, 0.0
        %v345 = vrot.slane %v344, 4
        %v346 = vadd.f32 %v344, %v345
        %v347 = vrot.slane %v346, 2
        %v348 = vadd.f32 %v346, %v347
        %v349 = vrot.slane %v348, 1
        %v350 = vadd.f32 %v348, %v349
        %v351 = vsel %vm306, %v303, 0.0
        %v352 = vrot.slane %v351, 4
        %v353 = vadd.f32 %v351, %v352
        %v354 = vrot.slane %v353, 2
        %v355 = vadd.f32 %v353, %v354
        %v356 = vrot.slane %v355, 1
        %v357 = vadd.f32 %v355, %v356
        %v358 = vsel %vm306, %v304, 0.0
        %v359 = vrot.slane %v358, 4
        %v360 = vadd.f32 %v358, %v359
        %v361 = vrot.slane %v360, 2
        %v362 = vadd.f32 %v360, %v361
        %v363 = vrot.slane %v362, 1
        %v364 = vadd.f32 %v362, %v363
        %v368 = vsel %vm331, %v357, %v350
        %v369 = vsel %vm333, %v364, %v368
        %v371 = vsel %vm336, %v369, 0.0
        %372 = vadd.xlane.f32.xlu0 %v371
        %v373 = vpop.xlane.xlu0 %372
        %v374 = vadd.f32 %v343, %v373
        %375 = vst.msk [vmem:[#allocation3] sm:$0x7] %vm341, %v374
        %v376 = vld [vmem:[#allocation4] sm:$0x7]
        %v377 = vsel %vm306, %v271, 0.0
        %v378 = vrot.slane %v377, 4
        %v379 = vadd.f32 %v377, %v378
        %v380 = vrot.slane %v379, 2
        %v381 = vadd.f32 %v379, %v380
        %v382 = vrot.slane %v381, 1
        %v383 = vadd.f32 %v381, %v382
        %v384 = vsel %vm306, %v272, 0.0
        %v385 = vrot.slane %v384, 4
        %v386 = vadd.f32 %v384, %v385
        %v387 = vrot.slane %v386, 2
        %v388 = vadd.f32 %v386, %v387
        %v389 = vrot.slane %v388, 1
        %v390 = vadd.f32 %v388, %v389
        %v391 = vsel %vm306, %v273, 0.0
        %v392 = vrot.slane %v391, 4
        %v393 = vadd.f32 %v391, %v392
        %v394 = vrot.slane %v393, 2
        %v395 = vadd.f32 %v393, %v394
        %v396 = vrot.slane %v395, 1
        %v397 = vadd.f32 %v395, %v396
        %v401 = vsel %vm331, %v390, %v383
        %v402 = vsel %vm333, %v397, %v401
        %v404 = vsel %vm336, %v402, 0.0
        %405 = vadd.xlane.f32.xlu0 %v404
        %v406 = vpop.xlane.xlu0 %405
        %v407 = vadd.f32 %v376, %v406
        %408 = vst.msk [vmem:[#allocation4] sm:$0x7] %vm341, %v407
        %v409 = vld [vmem:[#allocation5] sm:$0x7]
        %v410 = vsel %vm306, %v299, 0.0
        %v411 = vrot.slane %v410, 4
        %v412 = vadd.f32 %v410, %v411
        %v413 = vrot.slane %v412, 2
        %v414 = vadd.f32 %v412, %v413
        %v415 = vrot.slane %v414, 1
        %v416 = vadd.f32 %v414, %v415
        %v417 = vsel %vm306, %v300, 0.0
        %v418 = vrot.slane %v417, 4
        %v419 = vadd.f32 %v417, %v418
        %v420 = vrot.slane %v419, 2
        %v421 = vadd.f32 %v419, %v420
        %v422 = vrot.slane %v421, 1
        %v423 = vadd.f32 %v421, %v422
        %v424 = vsel %vm306, %v301, 0.0
        %v425 = vrot.slane %v424, 4
        %v426 = vadd.f32 %v424, %v425
        %v427 = vrot.slane %v426, 2
        %v428 = vadd.f32 %v426, %v427
        %v429 = vrot.slane %v428, 1
        %v430 = vadd.f32 %v428, %v429
        %v434 = vsel %vm331, %v423, %v416
        %v435 = vsel %vm333, %v430, %v434
        %v437 = vsel %vm336, %v435, 0.0
        %438 = vadd.xlane.f32.xlu0 %v437
        %v439 = vpop.xlane.xlu0 %438
        %v440 = vadd.f32 %v409, %v439
        %441 = vst.msk [vmem:[#allocation5] sm:$0x7] %vm341, %v440
        // Predicated region
        $region41: #{tpu_custom_call.1} parent=27 // pred_check
          %p442 = pneg %p261
        $region42: #{tpu_custom_call.1} parent=27 // pred_check_branch
          %444 = sbr.rel (%p442) target = $region44
        $region43: #{tpu_custom_call.1} parent=27 // pred_region
          %v445 = vld [vmem:[#allocation2] sm:$0x7]
          %v446 = vsub.f32 0.0, %v445
          %447 = vst.msk [vmem:[%s260] sm:$0x7] %vm341, %v446
          %v448 = vld [vmem:[#allocation3] sm:$0x7]
          %450 = vrot.lane.b32.xlu0 %v448, 1
          %v451 = vpop.permute.xlu0 %450
          %vm453 = vcmask 10248
          %454 = vst.msk [vmem:[%s260] sm:$0x7] %vm453, %v451
          %v455 = vld [vmem:[#allocation4] sm:$0x7]
          %457 = vrot.lane.b32.xlu0 %v455, 2
          %v458 = vpop.permute.xlu0 %457
          %vm460 = vcmask 18448
          %461 = vst.msk [vmem:[%s260] sm:$0x7] %vm460, %v458
          %v462 = vld [vmem:[#allocation5] sm:$0x7]
          %464 = vrot.lane.b32.xlu0 %v462, 3
          %v465 = vpop.permute.xlu0 %464
          %vm467 = vcmask 26648
          %468 = vst.msk [vmem:[%s260] sm:$0x7] %vm467, %v465
        $region44: #{tpu_custom_call.1} parent=27 // pred_fallthru
          _
        %p469 = scmp.lt.s32.totalorder %s24, 0
        %s470 = scalar_select %p469, %s24, 0
        %p471 = scmp.lt.s32.totalorder %s25, 1
        %s472 = scalar_select %p471, %s25, 1
        %s473 = smul.addr %s470, 2
        %s474 = sadd.s32 %s472, %s473
        %s475 = smul.addr %s474, 4
        %s476 = scalar_lea.vmem %s2, %s475
        // Predicated region
        $region45: #{tpu_custom_call.1} parent=27 // pred_check
          %p477 = pneg %p126
        $region46: #{tpu_custom_call.1} parent=27 // pred_check_branch
          %479 = sbr.rel (%p477) target = $region48
        $region47: #{tpu_custom_call.1} parent=27 // pred_region
          _
        $region48: #{tpu_custom_call.1} parent=27 // pred_fallthru
          _
      $region28: #{tpu_custom_call.1} parent=5 // pred_fallthru
        _
      %p480 = scmp.le.s32.totalorder 2, %s14
      // Predicated region
      $region49: #{tpu_custom_call.1} parent=5 // pred_check
        %p481 = pneg %p480
      $region50: #{tpu_custom_call.1} parent=5 // pred_check_branch
        %483 = sbr.rel (%p481) target = $region52
      $region51: #{tpu_custom_call.1} parent=5 // pred_region
        %s484 = ssub.s32 %s14, 2
        // Predicated region
        $region53: #{tpu_custom_call.1} parent=51 // pred_check
          %p485 = pneg %p132
        $region54: #{tpu_custom_call.1} parent=51 // pred_check_branch
          %487 = sbr.rel (%p485) target = $region56
        $region55: #{tpu_custom_call.1} parent=51 // pred_region
          %p488 = scmp.lt.s32.totalorder %s27, 0
          %s489 = scalar_select %p488, %s27, 0
          %p490 = scmp.lt.s32.totalorder %s28, 1
          %s491 = scalar_select %p490, %s28, 1
          %s492 = smul.addr %s489, 2
          %s493 = sadd.s32 %s491, %s492
          %s494 = smul.addr %s493, 4
          %s495 = scalar_lea.vmem %s2, %s494
        $region56: #{tpu_custom_call.1} parent=51 // pred_fallthru
          _
      $region52: #{tpu_custom_call.1} parent=5 // pred_fallthru
        _
    $region6: #{tpu_custom_call.1} parent=1 // loop_footer
      %s18 = sadd.s32 1, %s14
    $region7: #{tpu_custom_call.1} parent=1 // loop_footer_branch
      %13 = sbr.rel target = $region3
    $region8: #{tpu_custom_call.1} parent=1 // loop_exit
      _
    %496 = vsyncpa [#allocation7], 1
    %s497 = scalar_lea.sflag [#allocation7], 1
    %498 = vsyncpa %s497, 1
    %499 = vsyncpa [#allocation9], 1
    %s500 = scalar_lea.sflag [#allocation9], 1
    %501 = vsyncpa %s500, 1

</llo_original>
